<compile_context>
chip_gen: v7x
topology: tpu7x:2x2x1
jax: 0.10.0
libtpu: 0.0.40
codegen_flags: <defaults>
</compile_context>

<pallas_src>
import jax
import jax.numpy as jnp
import numpy as np
from jax.experimental import pallas as pl
from jax.experimental.pallas import tpu as pltpu

DIR_DIM, POS_DIM, VEL_DIM = 12, 9, 9
HEAD_DIM = DIR_DIM + POS_DIM + VEL_DIM      # 30
IN_DIM = 16 + 8                             # latent_dim + 8 = 24
HID_DIM = int(IN_DIM * 1.5 // 2 * 2)        # 36


def _round_up(x, m):
    return (x + m - 1) // m * m


def decoder_kernel(x_ref, w1_ref, b1_ref, wh_ref, bh_ref, g_ref, off_ref, out_ref):
    # Batch-on-lanes layout: every operand / intermediate is (feature, tile) so the
    # large tile axis sits on the 128-lane dim -> lane-dense loads, compute, stores.
    # Hidden layer: Linear + ReLU (one MXU push + VPU max).
    feat = jnp.maximum(
        jnp.dot(w1_ref[...], x_ref[...], preferred_element_type=jnp.float32)
        + b1_ref[...], 0.0)                                          # (36, tile)
    # All three output heads fused into one (30, 36) weight -> one MXU push.
    heads = (jnp.dot(wh_ref[...], feat, preferred_element_type=jnp.float32)
             + bh_ref[...])                                          # (30, tile)
    # Per-3-vector L2 normalisation of the direction rows, folded into one scale:
    # G @ heads^2 sums squares within each direction triple and is 0 on the
    # position/velocity rows; `off` adds 1 there so rsqrt yields exactly 1 (identity).
    norm_sq = jnp.dot(g_ref[...], heads * heads, preferred_element_type=jnp.float32)
    out_ref[...] = heads * jax.lax.rsqrt(norm_sq + off_ref[...])


def decoder_forward(latent_code, params, *, row_tile=8192):
    B, L, Din = latent_code.shape
    N = B * L

    # Row tiling (rows live on the lane axis):
    #  * small N  -> one lane-padded block (launch-latency bound anyway)
    #  * large N  -> big blocks (rows carry only ~216 B each, so per-step overhead
    #    dominates small tiles), and at least 2 grid steps so both v7x TensorCores
    #    get work under dimension_semantics=("parallel",).
    if N <= 1024:
        tile = _round_up(N, 128)
    else:
        tile = min(row_tile, _round_up(-(-N // 2), 128))
    n_pad = _round_up(N, tile)
    grid = (n_pad // tile,)

    # Wrapper-side layout plumbing: batch-on-lanes (Din, N) slab, padded so every
    # block's lane dim is a multiple of 128.  Padded columns are sliced off below.
    x_t = latent_code.reshape(N, Din).astype(jnp.float32).T          # (24, N)
    if n_pad != N:
        x_t = jnp.pad(x_t, ((0, 0), (0, n_pad - N)))

    cols = lambda i: (0, i)     # row-blocked (lane-blocked) operands
    whole = lambda i: (0, 0)    # weights / constants stay resident across steps

    out_t = pl.pallas_call(
        decoder_kernel,
        out_shape=jax.ShapeDtypeStruct((HEAD_DIM, n_pad), jnp.float32),
        grid=grid,
        in_specs=[
            pl.BlockSpec((Din, tile), cols),             # x^T
            pl.BlockSpec((HID_DIM, Din), whole),         # w1  (PyTorch (out,in) layout)
            pl.BlockSpec((HID_DIM, 1), whole),           # b1
            pl.BlockSpec((HEAD_DIM, HID_DIM), whole),    # fused head weights (dir|pos|vel)
            pl.BlockSpec((HEAD_DIM, 1), whole),          # fused head bias
            pl.BlockSpec((HEAD_DIM, HEAD_DIM), whole),   # G (group-sum matrix)
            pl.BlockSpec((HEAD_DIM, 1), whole),          # off
        ],
        out_specs=pl.BlockSpec((HEAD_DIM, tile), cols),
        compiler_params=pltpu.CompilerParams(dimension_semantics=("parallel",)),
    )(x_t, params["w1"], params["b1"], params["w_heads"], params["b_heads"],
      params["g"], params["off"])

    # Back to the PyTorch output-dict layout (free wrapper-side split).
    full = out_t[:, :N].T.reshape(B, L, HEAD_DIM)
    return {
        "direction": full[..., :DIR_DIM],
        "position": full[..., DIR_DIM:DIR_DIM + POS_DIM],
        "velocity": full[..., DIR_DIM + POS_DIM:],
    }


def init_params(key, scale=0.2):
    ks = jax.random.split(key, 8)
    # PyTorch nn.Linear weight layout: (out_features, in_features).
    w1 = jax.random.normal(ks[0], (HID_DIM, IN_DIM), jnp.float32) * scale
    b1 = jax.random.normal(ks[1], (HID_DIM, 1), jnp.float32) * scale
    wd = jax.random.normal(ks[2], (DIR_DIM, HID_DIM), jnp.float32) * scale
    bd = jax.random.normal(ks[3], (DIR_DIM, 1), jnp.float32) * scale
    wp = jax.random.normal(ks[4], (POS_DIM, HID_DIM), jnp.float32) * scale
    bp = jax.random.normal(ks[5], (POS_DIM, 1), jnp.float32) * scale
    wv = jax.random.normal(ks[6], (VEL_DIM, HID_DIM), jnp.float32) * scale
    bv = jax.random.normal(ks[7], (VEL_DIM, 1), jnp.float32) * scale
    # Fuse the three heads into a single Linear (one matmul, one dense store).
    w_heads = jnp.concatenate([wd, wp, wv], axis=0)   # (30, 36)
    b_heads = jnp.concatenate([bd, bp, bv], axis=0)   # (30, 1)
    # Host-precomputed constants for the fused direction normalisation.
    g = np.zeros((HEAD_DIM, HEAD_DIM), np.float32)
    g[:DIR_DIM, :DIR_DIM] = np.kron(np.eye(DIR_DIM // 3, dtype=np.float32),
                                    np.ones((3, 3), np.float32))
    off = np.concatenate([np.zeros((DIR_DIM, 1), np.float32),
                          np.ones((POS_DIM + VEL_DIM, 1), np.float32)], axis=0)
    return {"w1": w1, "b1": b1, "w_heads": w_heads, "b_heads": b_heads,
            "g": jnp.asarray(g), "off": jnp.asarray(off)}


def decoder_ref(latent_code, params):
    """Pure-JAX reference matching the PyTorch forward."""
    B, L, _ = latent_code.shape
    x = latent_code.reshape(-1, IN_DIM)
    feat = jnp.maximum(x @ params["w1"].T + params["b1"][:, 0], 0.0)
    heads = feat @ params["w_heads"].T + params["b_heads"][:, 0]
    d = heads[:, :DIR_DIM].reshape(-1, DIR_DIM // 3, 3)
    d = d / jnp.linalg.norm(d, axis=-1, keepdims=True)
    return {
        "direction": d.reshape(B, L, DIR_DIM),
        "position": heads[:, DIR_DIM:DIR_DIM + POS_DIM].reshape(B, L, POS_DIM),
        "velocity": heads[:, DIR_DIM + POS_DIM:].reshape(B, L, VEL_DIM),
    }


if __name__ == "__main__":
    key = jax.random.PRNGKey(0)
    kx, kp = jax.random.split(key)

    B, L = 2, 8
    latent_code = jax.random.normal(kx, (B, L, IN_DIM), jnp.float32)  # (2, 8, 24)
    params = init_params(kp)

    fwd = jax.jit(decoder_forward)
    out = fwd(latent_code, params)
    jax.block_until_ready(out)

    assert out["direction"].shape == (B, L, DIR_DIM)
    assert out["position"].shape == (B, L, POS_DIM)
    assert out["velocity"].shape == (B, L, VEL_DIM)

    ref = decoder_ref(latent_code, params)
    for k in ("direction", "position", "velocity"):
        np.testing.assert_allclose(np.asarray(out[k]), np.asarray(ref[k]),
                                   rtol=1e-4, atol=1e-4)
    # Direction must be unit-norm per 3-vector (matches the torch.norm / divide path).
    dn = np.asarray(out["direction"]).reshape(B, L, -1, 3)
    assert np.allclose(np.linalg.norm(dn, axis=-1), 1.0, atol=1e-4)
    print("KERNEL_OK")
</pallas_src>

<mosaic_0001>
module attributes {stable_mosaic.version = 11 : i64} {
  func.func @decoder_kernel(%arg0: i32, %arg1: memref<24x128xf32, #tpu.memory_space<vmem>>, %arg2: memref<36x24xf32, #tpu.memory_space<vmem>>, %arg3: memref<36x1xf32, #tpu.memory_space<vmem>>, %arg4: memref<30x36xf32, #tpu.memory_space<vmem>>, %arg5: memref<30x1xf32, #tpu.memory_space<vmem>>, %arg6: memref<30x30xf32, #tpu.memory_space<vmem>>, %arg7: memref<30x1xf32, #tpu.memory_space<vmem>>, %arg8: memref<30x128xf32, #tpu.memory_space<vmem>>) attributes {dimension_semantics = [#tpu.dimension_semantics<parallel>], iteration_bounds = array<i64: 1>, scalar_prefetch = 0 : i64, scratch_operands = 0 : i64, tpu.core_type = #tpu.core_type<tc>, window_params = [{transform_indices = @transform_0, window_bounds = array<i64: 24, 128>}, {pipeline_mode = #tpu.pipeline_mode<synchronous>, transform_indices = @transform_1, window_bounds = array<i64: 36, 24>}, {pipeline_mode = #tpu.pipeline_mode<synchronous>, transform_indices = @transform_2, window_bounds = array<i64: 36, 1>}, {pipeline_mode = #tpu.pipeline_mode<synchronous>, transform_indices = @transform_3, window_bounds = array<i64: 30, 36>}, {pipeline_mode = #tpu.pipeline_mode<synchronous>, transform_indices = @transform_4, window_bounds = array<i64: 30, 1>}, {pipeline_mode = #tpu.pipeline_mode<synchronous>, transform_indices = @transform_5, window_bounds = array<i64: 30, 30>}, {pipeline_mode = #tpu.pipeline_mode<synchronous>, transform_indices = @transform_6, window_bounds = array<i64: 30, 1>}, {transform_indices = @transform_7, window_bounds = array<i64: 30, 128>}]} {
    %c0 = arith.constant 0 : index
    %c0_0 = arith.constant 0 : index
    %0 = vector.load %arg2[%c0, %c0_0] : memref<36x24xf32, #tpu.memory_space<vmem>>, vector<36x24xf32>
    %c0_1 = arith.constant 0 : index
    %c0_2 = arith.constant 0 : index
    %1 = vector.load %arg1[%c0_1, %c0_2] : memref<24x128xf32, #tpu.memory_space<vmem>>, vector<24x128xf32>
    %cst = arith.constant dense<0.000000e+00> : vector<36x128xf32>
    %2 = tpu.matmul %0, %1, %cst {dimension_numbers = #tpu.dot_dimension_numbers<[1], [0], [0], [1], [0, 0, 1, 1], [], []>} : vector<36x24xf32>, vector<24x128xf32>, vector<36x128xf32> -> vector<36x128xf32>
    %c0_3 = arith.constant 0 : index
    %c0_4 = arith.constant 0 : index
    %3 = vector.load %arg3[%c0_3, %c0_4] : memref<36x1xf32, #tpu.memory_space<vmem>>, vector<36x1xf32>
    %4 = vector.broadcast %3 : vector<36x1xf32> to vector<36x128xf32>
    %5 = arith.addf %2, %4 : vector<36x128xf32>
    %cst_5 = arith.constant 0.000000e+00 : f32
    %6 = vector.broadcast %cst_5 : f32 to vector<36x128xf32>
    %7 = arith.maximumf %5, %6 : vector<36x128xf32>
    %c0_6 = arith.constant 0 : index
    %c0_7 = arith.constant 0 : index
    %8 = vector.load %arg4[%c0_6, %c0_7] : memref<30x36xf32, #tpu.memory_space<vmem>>, vector<30x36xf32>
    %cst_8 = arith.constant dense<0.000000e+00> : vector<30x128xf32>
    %9 = tpu.matmul %8, %7, %cst_8 {dimension_numbers = #tpu.dot_dimension_numbers<[1], [0], [0], [1], [0, 0, 1, 1], [], []>} : vector<30x36xf32>, vector<36x128xf32>, vector<30x128xf32> -> vector<30x128xf32>
    %c0_9 = arith.constant 0 : index
    %c0_10 = arith.constant 0 : index
    %10 = vector.load %arg5[%c0_9, %c0_10] : memref<30x1xf32, #tpu.memory_space<vmem>>, vector<30x1xf32>
    %11 = vector.broadcast %10 : vector<30x1xf32> to vector<30x128xf32>
    %12 = arith.addf %9, %11 : vector<30x128xf32>
    %c0_11 = arith.constant 0 : index
    %c0_12 = arith.constant 0 : index
    %13 = vector.load %arg6[%c0_11, %c0_12] : memref<30x30xf32, #tpu.memory_space<vmem>>, vector<30x30xf32>
    %14 = arith.mulf %12, %12 : vector<30x128xf32>
    %cst_13 = arith.constant dense<0.000000e+00> : vector<30x128xf32>
    %15 = tpu.matmul %13, %14, %cst_13 {dimension_numbers = #tpu.dot_dimension_numbers<[1], [0], [0], [1], [0, 0, 1, 1], [], []>} : vector<30x30xf32>, vector<30x128xf32>, vector<30x128xf32> -> vector<30x128xf32>
    %c0_14 = arith.constant 0 : index
    %c0_15 = arith.constant 0 : index
    %16 = vector.load %arg7[%c0_14, %c0_15] : memref<30x1xf32, #tpu.memory_space<vmem>>, vector<30x1xf32>
    %17 = vector.broadcast %16 : vector<30x1xf32> to vector<30x128xf32>
    %18 = arith.addf %15, %17 : vector<30x128xf32>
    %19 = math.rsqrt %18 : vector<30x128xf32>
    %20 = arith.mulf %12, %19 : vector<30x128xf32>
    %c0_16 = arith.constant 0 : index
    %c0_17 = arith.constant 0 : index
    %21 = vector.load %arg8[%c0_16, %c0_17] : memref<30x128xf32, #tpu.memory_space<vmem>>, vector<30x128xf32>
    tpu.vector_store %arg8[%c0_16, %c0_17], %20 {strides = array<i32>} : memref<30x128xf32, #tpu.memory_space<vmem>>, vector<30x128xf32>,
    return
  }
  func.func @transform_0(%arg0: i32) -> (i32, i32) {
    %c0_i32 = arith.constant 0 : i32
    %c0_i32_0 = arith.constant 0 : i32
    return %c0_i32, %arg0 : i32, i32
  }
  func.func @transform_1(%arg0: i32) -> (i32, i32) {
    %c0_i32 = arith.constant 0 : i32
    %c0_i32_0 = arith.constant 0 : i32
    %c0_i32_1 = arith.constant 0 : i32
    return %c0_i32, %c0_i32_0 : i32, i32
  }
  func.func @transform_2(%arg0: i32) -> (i32, i32) {
    %c0_i32 = arith.constant 0 : i32
    %c0_i32_0 = arith.constant 0 : i32
    %c0_i32_1 = arith.constant 0 : i32
    return %c0_i32, %c0_i32_0 : i32, i32
  }
  func.func @transform_3(%arg0: i32) -> (i32, i32) {
    %c0_i32 = arith.constant 0 : i32
    %c0_i32_0 = arith.constant 0 : i32
    %c0_i32_1 = arith.constant 0 : i32
    return %c0_i32, %c0_i32_0 : i32, i32
  }
  func.func @transform_4(%arg0: i32) -> (i32, i32) {
    %c0_i32 = arith.constant 0 : i32
    %c0_i32_0 = arith.constant 0 : i32
    %c0_i32_1 = arith.constant 0 : i32
    return %c0_i32, %c0_i32_0 : i32, i32
  }
  func.func @transform_5(%arg0: i32) -> (i32, i32) {
    %c0_i32 = arith.constant 0 : i32
    %c0_i32_0 = arith.constant 0 : i32
    %c0_i32_1 = arith.constant 0 : i32
    return %c0_i32, %c0_i32_0 : i32, i32
  }
  func.func @transform_6(%arg0: i32) -> (i32, i32) {
    %c0_i32 = arith.constant 0 : i32
    %c0_i32_0 = arith.constant 0 : i32
    %c0_i32_1 = arith.constant 0 : i32
    return %c0_i32, %c0_i32_0 : i32, i32
  }
  func.func @transform_7(%arg0: i32) -> (i32, i32) {
    %c0_i32 = arith.constant 0 : i32
    %c0_i32_0 = arith.constant 0 : i32
    return %c0_i32, %arg0 : i32, i32
  }
}

</mosaic_0001>

<llo_original>
// kernel: decoder_forward.1
$region0: #{decoder_forward.1}
  #allocation0 [shape = 'u32[]', space=smem, size = 0x4, offset = 0x4, fixed_abs, tag = 'smem constant byte address 0x4 - core index']
  #allocation1 [shape = 'u32[144,128]{1,0:T(1,128)}', space=vmem, size = 0x12000, scoped, tag = 'internal scratch']
  %s0 = inlined_call_operand.vmem [shape: f32[24,128], index: 0, kind: input, shape index: {}]
  %s1 = inlined_call_operand.vmem [shape: f32[36,24], index: 1, kind: input, shape index: {}]
  %s2 = inlined_call_operand.vmem [shape: f32[36,1], index: 2, kind: input, shape index: {}]
  %s3 = inlined_call_operand.vmem [shape: f32[30,36], index: 3, kind: input, shape index: {}]
  %s4 = inlined_call_operand.vmem [shape: f32[30,1], index: 4, kind: input, shape index: {}]
  %s5 = inlined_call_operand.vmem [shape: f32[30,30], index: 5, kind: input, shape index: {}]
  %s6 = inlined_call_operand.vmem [shape: f32[30,1], index: 6, kind: input, shape index: {}]
  %s7 = inlined_call_operand.vmem [shape: f32[30,128], index: 7, kind: output, shape index: {}]
  %s8 = sld [smem:[#allocation0]]
  $region38: #{decoder_forward.1} parent=0
    _
  %s10 = ssub.s32 1, %s8
  %s11 = scalar_select 0, %s10, %s8
  // Predicated region
  $region2: #{decoder_forward.1} parent=0 // pred_check
    _
  $region3: #{decoder_forward.1} parent=0 // pred_check_branch
    %13 = sbr.rel (0) target = $region5
  $region4: #{decoder_forward.1} parent=0 // pred_region
    _
  $region5: #{decoder_forward.1} parent=0 // pred_fallthru
    _
  // Predicated region
  $region6: #{decoder_forward.1} parent=0 // pred_check
    _
  $region7: #{decoder_forward.1} parent=0 // pred_check_branch
    %15 = sbr.rel (0) target = $region9
  $region8: #{decoder_forward.1} parent=0 // pred_region
    _
  $region9: #{decoder_forward.1} parent=0 // pred_fallthru
    _
  // Predicated region
  $region10: #{decoder_forward.1} parent=0 // pred_check
    _
  $region11: #{decoder_forward.1} parent=0 // pred_check_branch
    %17 = sbr.rel (0) target = $region13
  $region12: #{decoder_forward.1} parent=0 // pred_region
    _
  $region13: #{decoder_forward.1} parent=0 // pred_fallthru
    _
  // Predicated region
  $region14: #{decoder_forward.1} parent=0 // pred_check
    _
  $region15: #{decoder_forward.1} parent=0 // pred_check_branch
    %19 = sbr.rel (0) target = $region17
  $region16: #{decoder_forward.1} parent=0 // pred_region
    _
  $region17: #{decoder_forward.1} parent=0 // pred_fallthru
    _
  // Predicated region
  $region18: #{decoder_forward.1} parent=0 // pred_check
    _
  $region19: #{decoder_forward.1} parent=0 // pred_check_branch
    %21 = sbr.rel (0) target = $region21
  $region20: #{decoder_forward.1} parent=0 // pred_region
    _
  $region21: #{decoder_forward.1} parent=0 // pred_fallthru
    _
  // Predicated region
  $region22: #{decoder_forward.1} parent=0 // pred_check
    _
  $region23: #{decoder_forward.1} parent=0 // pred_check_branch
    %23 = sbr.rel (0) target = $region25
  $region24: #{decoder_forward.1} parent=0 // pred_region
    _
  $region25: #{decoder_forward.1} parent=0 // pred_fallthru
    _
  // Predicated region
  $region26: #{decoder_forward.1} parent=0 // pred_check
    _
  $region27: #{decoder_forward.1} parent=0 // pred_check_branch
    %25 = sbr.rel (0) target = $region29
  $region28: #{decoder_forward.1} parent=0 // pred_region
    _
  $region29: #{decoder_forward.1} parent=0 // pred_fallthru
    _
  %v26 = vld [vmem:[%s1] sm:$0xff]
  %v27 = vld [vmem:[%s1 + $0x8] sm:$0xff]
  %v28 = vld [vmem:[%s1 + $0x10] sm:$0xff]
  %v29 = vld [vmem:[%s1 + $0x18] sm:$0xff]
  %v30 = vld [vmem:[%s1 + $0x20] sm:$0xf]
  %v31 = vld [vmem:[%s0] sm:$0xff]
  %v32 = vld [vmem:[%s0 + $0x8] sm:$0xff]
  %v33 = vld [vmem:[%s0 + $0x10] sm:$0xff]
  %v34 = vld [vmem:[%s2] sm:$0xff]
  %v35 = vld [vmem:[%s2 + $0x8] sm:$0xff]
  %v36 = vld [vmem:[%s2 + $0x10] sm:$0xff]
  %v37 = vld [vmem:[%s2 + $0x18] sm:$0xff]
  %v38 = vld [vmem:[%s2 + $0x20] sm:$0xf]
  %40 = vset.pattern.permute.xlu0 0
  %41 = vperm.xlu0 %40, %v34
  %v42 = vpop.permute.xlu0 %41
  %45 = vset.pattern.permute.xlu0 0
  %46 = vperm.xlu0 %45, %v35
  %v47 = vpop.permute.xlu0 %46
  %50 = vset.pattern.permute.xlu0 0
  %51 = vperm.xlu0 %50, %v36
  %v52 = vpop.permute.xlu0 %51
  %55 = vset.pattern.permute.xlu0 0
  %56 = vperm.xlu0 %55, %v37
  %v57 = vpop.permute.xlu0 %56
  %60 = vset.pattern.permute.xlu0 0
  %61 = vperm.xlu0 %60, %v38
  %v62 = vpop.permute.xlu0 %61
  %vm64 = vcmask 195584
  %v66 = vsel %vm64, %v26, 0
  %v69 = vsel %vm64, %v27, 0
  %v72 = vsel %vm64, %v28, 0
  %v75 = vsel %vm64, %v29, 0
  %v78 = vsel %vm64, %v30, 0
  %80 = vmatprep.subr.mxu0 0.0
  %81 = vmatpush1.msra.mxu0 %v31
  %82 = vmatprep.subr.mxu0 0.0
  %83 = vmatpush1.msra.mxu0 %v32
  %84 = vmatprep.subr.mxu0 0.0
  %85 = vmatpush1.msra.mxu0 %v33
  %86 = vmatprep.subr.mxu0 0.0
  %87 = vmatpush1.msra.mxu0 0.0
  %88 = vmatprep.subr.mxu0 0.0
  %89 = vmatpush1.msra.mxu0 0.0
  %90 = vmatprep.subr.mxu0 0.0
  %91 = vmatpush1.msra.mxu0 0.0
  %92 = vmatprep.subr.mxu0 0.0
  %93 = vmatpush1.msra.mxu0 0.0
  %94 = vmatprep.subr.mxu0 0.0
  %95 = vmatpush1.msra.mxu0 0.0
  %96 = vmatprep.subr.mxu0 0.0
  %97 = vmatpush1.msra.mxu0 0.0
  %98 = vmatprep.subr.mxu0 0.0
  %99 = vmatpush1.msra.mxu0 0.0
  %100 = vmatprep.subr.mxu0 0.0
  %101 = vmatpush1.msra.mxu0 0.0
  %102 = vmatprep.subr.mxu0 0.0
  %103 = vmatpush1.msra.mxu0 0.0
  %104 = vmatprep.subr.mxu0 0.0
  %105 = vmatpush1.msra.mxu0 0.0
  %106 = vmatprep.subr.mxu0 0.0
  %107 = vmatpush1.msra.mxu0 0.0
  %108 = vmatprep.subr.mxu0 0.0
  %109 = vmatpush1.msra.mxu0 0.0
  %110 = vmatprep.subr.mxu0 0.0
  %111 = vmatpush1.msra.mxu0 0.0
  %112 = vmatprep.subr.mxu0 0.0
  %113 = vmatpush1.msra.mxu0 0.0
  %114 = vmatprep.subr.mxu0 0.0
  %115 = vmatpush1.msra.mxu0 0.0
  %116 = vmatprep.subr.mxu0 0.0
  %117 = vmatpush1.msra.mxu0 0.0
  %118 = vmatprep.subr.mxu0 0.0
  %119 = vmatpush1.msra.mxu0 0.0
  %120 = vmatprep.subr.mxu0 0.0
  %121 = vmatpush1.msra.mxu0 0.0
  %122 = vmatprep.subr.mxu0 0.0
  %123 = vmatpush1.msra.mxu0 0.0
  %124 = vmatprep.subr.mxu0 0.0
  %125 = vmatpush1.msra.mxu0 0.0
  %126 = vmatprep.subr.mxu0 0.0
  %127 = vmatpush1.msra.mxu0 0.0
  %128 = vmatprep.subr.mxu0 0.0
  %129 = vmatpush1.msra.mxu0 0.0
  %130 = vmatprep.subr.mxu0 0.0
  %131 = vmatpush1.msra.mxu0 0.0
  %132 = vmatprep.subr.mxu0 0.0
  %133 = vmatpush1.msra.mxu0 0.0
  %134 = vmatprep.subr.mxu0 0.0
  %135 = vmatpush1.msra.mxu0 0.0
  %136 = vmatprep.subr.mxu0 0.0
  %137 = vmatpush1.msra.mxu0 0.0
  %138 = vmatprep.subr.mxu0 0.0
  %139 = vmatpush1.msra.mxu0 0.0
  %140 = vmatprep.subr.mxu0 0.0
  %141 = vmatpush1.msra.mxu0 0.0
  %142 = vmatprep.subr.mxu0 0.0
  %143 = vmatpush1.msra.mxu0 0.0
  %144 = vmatprep.mubr.f32.mxu0 0.0
  %145 = vmatmul.mubr.f32.gmra.mrb[0].mxu0 %v66
  %v146 = vpop.f32.mrb[0].mxu0
  %v147 = vadd.f32 %v42, %v146
  %v148 = vpop.f32.mrb[0].mxu0
  %149 = vmatprep.mubr.f32.mxu0 0.0
  %150 = vmatmul.mubr.f32.gmra.mrb[0].mxu0 %v69
  %v151 = vpop.f32.mrb[0].mxu0
  %v152 = vadd.f32 %v47, %v151
  %v153 = vpop.f32.mrb[0].mxu0
  %154 = vmatprep.mubr.f32.mxu0 0.0
  %155 = vmatmul.mubr.f32.gmra.mrb[0].mxu0 %v72
  %v156 = vpop.f32.mrb[0].mxu0
  %v157 = vadd.f32 %v52, %v156
  %v158 = vpop.f32.mrb[0].mxu0
  %159 = vmatprep.mubr.f32.mxu0 0.0
  %160 = vmatmul.mubr.f32.gmra.mrb[0].mxu0 %v75
  %v161 = vpop.f32.mrb[0].mxu0
  %v162 = vadd.f32 %v57, %v161
  %v163 = vpop.f32.mrb[0].mxu0
  %164 = vmatprep.mubr.f32.mxu0 0.0
  %165 = vmatmul.mubr.f32.gmra.mrb[0].mxu0 %v78
  %v166 = vpop.f32.mrb[0].mxu0
  %v167 = vadd.f32 %v62, %v166
  %v168 = vpop.f32.mrb[0].mxu0
  %169 = vdwg.mxu0
  %v170 = vmax.f32 %v147, 0.0
  %v171 = vmax.f32 %v152, 0.0
  %v172 = vmax.f32 %v157, 0.0
  %v173 = vmax.f32 %v162, 0.0
  %v174 = vmax.f32 %v167, 0.0
  %v175 = vld [vmem:[%s3] sm:$0xff]
  %v176 = vld [vmem:[%s3 + $0x8] sm:$0xff]
  %v177 = vld [vmem:[%s3 + $0x10] sm:$0xff]
  %v178 = vld [vmem:[%s3 + $0x18] sm:$0x3f]
  %v179 = vld [vmem:[%s4] sm:$0xff]
  %v180 = vld [vmem:[%s4 + $0x8] sm:$0xff]
  %v181 = vld [vmem:[%s4 + $0x10] sm:$0xff]
  %v182 = vld [vmem:[%s4 + $0x18] sm:$0x3f]
  %184 = vset.pattern.permute.xlu0 0
  %185 = vperm.xlu0 %184, %v179
  %v186 = vpop.permute.xlu0 %185
  %189 = vset.pattern.permute.xlu0 0
  %190 = vperm.xlu0 %189, %v180
  %v191 = vpop.permute.xlu0 %190
  %194 = vset.pattern.permute.xlu0 0
  %195 = vperm.xlu0 %194, %v181
  %v196 = vpop.permute.xlu0 %195
  %199 = vset.pattern.permute.xlu0 0
  %200 = vperm.xlu0 %199, %v182
  %v201 = vpop.permute.xlu0 %200
  %vm203 = vcmask 293888
  %v205 = vsel %vm203, %v175, 0
  %v208 = vsel %vm203, %v176, 0
  %v211 = vsel %vm203, %v177, 0
  %v214 = vsel %vm203, %v178, 0
  %vm216 = vcmask 1043456
  %v218 = vsel %vm216, %v174, 0
  %220 = vmatprep.subr.mxu0 0.0
  %221 = vmatpush1.msra.mxu0 %v170
  %222 = vmatprep.subr.mxu0 0.0
  %223 = vmatpush1.msra.mxu0 %v171
  %224 = vmatprep.subr.mxu0 0.0
  %225 = vmatpush1.msra.mxu0 %v172
  %226 = vmatprep.subr.mxu0 0.0
  %227 = vmatpush1.msra.mxu0 %v173
  %228 = vmatprep.subr.mxu0 0.0
  %229 = vmatpush1.msra.mxu0 %v218
  %230 = vmatprep.subr.mxu0 0.0
  %231 = vmatpush1.msra.mxu0 0.0
  %232 = vmatprep.subr.mxu0 0.0
  %233 = vmatpush1.msra.mxu0 0.0
  %234 = vmatprep.subr.mxu0 0.0
  %235 = vmatpush1.msra.mxu0 0.0
  %236 = vmatprep.subr.mxu0 0.0
  %237 = vmatpush1.msra.mxu0 0.0
  %238 = vmatprep.subr.mxu0 0.0
  %239 = vmatpush1.msra.mxu0 0.0
  %240 = vmatprep.subr.mxu0 0.0
  %241 = vmatpush1.msra.mxu0 0.0
  %242 = vmatprep.subr.mxu0 0.0
  %243 = vmatpush1.msra.mxu0 0.0
  %244 = vmatprep.subr.mxu0 0.0
  %245 = vmatpush1.msra.mxu0 0.0
  %246 = vmatprep.subr.mxu0 0.0
  %247 = vmatpush1.msra.mxu0 0.0
  %248 = vmatprep.subr.mxu0 0.0
  %249 = vmatpush1.msra.mxu0 0.0
  %250 = vmatprep.subr.mxu0 0.0
  %251 = vmatpush1.msra.mxu0 0.0
  %252 = vmatprep.subr.mxu0 0.0
  %253 = vmatpush1.msra.mxu0 0.0
  %254 = vmatprep.subr.mxu0 0.0
  %255 = vmatpush1.msra.mxu0 0.0
  %256 = vmatprep.subr.mxu0 0.0
  %257 = vmatpush1.msra.mxu0 0.0
  %258 = vmatprep.subr.mxu0 0.0
  %259 = vmatpush1.msra.mxu0 0.0
  %260 = vmatprep.subr.mxu0 0.0
  %261 = vmatpush1.msra.mxu0 0.0
  %262 = vmatprep.subr.mxu0 0.0
  %263 = vmatpush1.msra.mxu0 0.0
  %264 = vmatprep.subr.mxu0 0.0
  %265 = vmatpush1.msra.mxu0 0.0
  %266 = vmatprep.subr.mxu0 0.0
  %267 = vmatpush1.msra.mxu0 0.0
  %268 = vmatprep.subr.mxu0 0.0
  %269 = vmatpush1.msra.mxu0 0.0
  %270 = vmatprep.subr.mxu0 0.0
  %271 = vmatpush1.msra.mxu0 0.0
  %272 = vmatprep.subr.mxu0 0.0
  %273 = vmatpush1.msra.mxu0 0.0
  %274 = vmatprep.subr.mxu0 0.0
  %275 = vmatpush1.msra.mxu0 0.0
  %276 = vmatprep.subr.mxu0 0.0
  %277 = vmatpush1.msra.mxu0 0.0
  %278 = vmatprep.subr.mxu0 0.0
  %279 = vmatpush1.msra.mxu0 0.0
  %280 = vmatprep.subr.mxu0 0.0
  %281 = vmatpush1.msra.mxu0 0.0
  %282 = vmatprep.subr.mxu0 0.0
  %283 = vmatpush1.msra.mxu0 0.0
  %284 = vmatprep.mubr.f32.mxu0 0.0
  %285 = vmatmul.mubr.f32.gmra.mrb[0].mxu0 %v205
  %v286 = vpop.f32.mrb[0].mxu0
  %v287 = vadd.f32 %v186, %v286
  %v288 = vpop.f32.mrb[0].mxu0
  %289 = vmatprep.mubr.f32.mxu0 0.0
  %290 = vmatmul.mubr.f32.gmra.mrb[0].mxu0 %v208
  %v291 = vpop.f32.mrb[0].mxu0
  %v292 = vadd.f32 %v191, %v291
  %v293 = vpop.f32.mrb[0].mxu0
  %294 = vmatprep.mubr.f32.mxu0 0.0
  %295 = vmatmul.mubr.f32.gmra.mrb[0].mxu0 %v211
  %v296 = vpop.f32.mrb[0].mxu0
  %v297 = vadd.f32 %v196, %v296
  %v298 = vpop.f32.mrb[0].mxu0
  %299 = vmatprep.mubr.f32.mxu0 0.0
  %300 = vmatmul.mubr.f32.gmra.mrb[0].mxu0 %v214
  %v301 = vpop.f32.mrb[0].mxu0
  %v302 = vadd.f32 %v201, %v301
  %v303 = vpop.f32.mrb[0].mxu0
  %304 = vdwg.mxu0
  %v305 = vld [vmem:[%s5] sm:$0xff]
  %v306 = vld [vmem:[%s5 + $0x8] sm:$0xff]
  %v307 = vld [vmem:[%s5 + $0x10] sm:$0xff]
  %v308 = vld [vmem:[%s5 + $0x18] sm:$0x3f]
  %v309 = vmul.f32 %v287, %v287
  %v310 = vmul.f32 %v292, %v292
  %v311 = vmul.f32 %v297, %v297
  %v312 = vmul.f32 %v302, %v302
  %v313 = vld [vmem:[%s6] sm:$0xff]
  %v314 = vld [vmem:[%s6 + $0x8] sm:$0xff]
  %v315 = vld [vmem:[%s6 + $0x10] sm:$0xff]
  %v316 = vld [vmem:[%s6 + $0x18] sm:$0x3f]
  %318 = vset.pattern.permute.xlu0 0
  %319 = vperm.xlu0 %318, %v313
  %v320 = vpop.permute.xlu0 %319
  %323 = vset.pattern.permute.xlu0 0
  %324 = vperm.xlu0 %323, %v314
  %v325 = vpop.permute.xlu0 %324
  %328 = vset.pattern.permute.xlu0 0
  %329 = vperm.xlu0 %328, %v315
  %v330 = vpop.permute.xlu0 %329
  %333 = vset.pattern.permute.xlu0 0
  %334 = vperm.xlu0 %333, %v316
  %v335 = vpop.permute.xlu0 %334
  %vm337 = vcmask 244736
  %v339 = vsel %vm337, %v305, 0
  %v342 = vsel %vm337, %v306, 0
  %v345 = vsel %vm337, %v307, 0
  %v348 = vsel %vm337, %v308, 0
  %vm350 = vcmask 1045504
  %v352 = vsel %vm350, %v312, 0
  %354 = vmatprep.subr.mxu0 0.0
  %355 = vmatpush1.msra.mxu0 %v309
  %356 = vmatprep.subr.mxu0 0.0
  %357 = vmatpush1.msra.mxu0 %v310
  %358 = vmatprep.subr.mxu0 0.0
  %359 = vmatpush1.msra.mxu0 %v311
  %360 = vmatprep.subr.mxu0 0.0
  %361 = vmatpush1.msra.mxu0 %v352
  %362 = vmatprep.subr.mxu0 0.0
  %363 = vmatpush1.msra.mxu0 0.0
  %364 = vmatprep.subr.mxu0 0.0
  %365 = vmatpush1.msra.mxu0 0.0
  %366 = vmatprep.subr.mxu0 0.0
  %367 = vmatpush1.msra.mxu0 0.0
  %368 = vmatprep.subr.mxu0 0.0
  %369 = vmatpush1.msra.mxu0 0.0
  %370 = vmatprep.subr.mxu0 0.0
  %371 = vmatpush1.msra.mxu0 0.0
  %372 = vmatprep.subr.mxu0 0.0
  %373 = vmatpush1.msra.mxu0 0.0
  %374 = vmatprep.subr.mxu0 0.0
  %375 = vmatpush1.msra.mxu0 0.0
  %376 = vmatprep.subr.mxu0 0.0
  %377 = vmatpush1.msra.mxu0 0.0
  %378 = vmatprep.subr.mxu0 0.0
  %379 = vmatpush1.msra.mxu0 0.0
  %380 = vmatprep.subr.mxu0 0.0
  %381 = vmatpush1.msra.mxu0 0.0
  %382 = vmatprep.subr.mxu0 0.0
  %383 = vmatpush1.msra.mxu0 0.0
  %384 = vmatprep.subr.mxu0 0.0
  %385 = vmatpush1.msra.mxu0 0.0
  %386 = vmatprep.subr.mxu0 0.0
  %387 = vmatpush1.msra.mxu0 0.0
  %388 = vmatprep.subr.mxu0 0.0
  %389 = vmatpush1.msra.mxu0 0.0
  %390 = vmatprep.subr.mxu0 0.0
  %391 = vmatpush1.msra.mxu0 0.0
  %392 = vmatprep.subr.mxu0 0.0
  %393 = vmatpush1.msra.mxu0 0.0
  %394 = vmatprep.subr.mxu0 0.0
  %395 = vmatpush1.msra.mxu0 0.0
  %396 = vmatprep.subr.mxu0 0.0
  %397 = vmatpush1.msra.mxu0 0.0
  %398 = vmatprep.subr.mxu0 0.0
  %399 = vmatpush1.msra.mxu0 0.0
  %400 = vmatprep.subr.mxu0 0.0
  %401 = vmatpush1.msra.mxu0 0.0
  %402 = vmatprep.subr.mxu0 0.0
  %403 = vmatpush1.msra.mxu0 0.0
  %404 = vmatprep.subr.mxu0 0.0
  %405 = vmatpush1.msra.mxu0 0.0
  %406 = vmatprep.subr.mxu0 0.0
  %407 = vmatpush1.msra.mxu0 0.0
  %408 = vmatprep.subr.mxu0 0.0
  %409 = vmatpush1.msra.mxu0 0.0
  %410 = vmatprep.subr.mxu0 0.0
  %411 = vmatpush1.msra.mxu0 0.0
  %412 = vmatprep.subr.mxu0 0.0
  %413 = vmatpush1.msra.mxu0 0.0
  %414 = vmatprep.subr.mxu0 0.0
  %415 = vmatpush1.msra.mxu0 0.0
  %416 = vmatprep.subr.mxu0 0.0
  %417 = vmatpush1.msra.mxu0 0.0
  %418 = vmatprep.mubr.f32.mxu0 0.0
  %419 = vmatmul.mubr.f32.gmra.mrb[0].mxu0 %v339
  %v420 = vpop.f32.mrb[0].mxu0
  %v421 = vadd.f32 %v320, %v420
  %v422 = vpop.f32.mrb[0].mxu0
  %423 = vmatprep.mubr.f32.mxu0 0.0
  %424 = vmatmul.mubr.f32.gmra.mrb[0].mxu0 %v342
  %v425 = vpop.f32.mrb[0].mxu0
  %v426 = vadd.f32 %v325, %v425
  %v427 = vpop.f32.mrb[0].mxu0
  %428 = vmatprep.mubr.f32.mxu0 0.0
  %429 = vmatmul.mubr.f32.gmra.mrb[0].mxu0 %v345
  %v430 = vpop.f32.mrb[0].mxu0
  %v431 = vadd.f32 %v330, %v430
  %v432 = vpop.f32.mrb[0].mxu0
  %433 = vmatprep.mubr.f32.mxu0 0.0
  %434 = vmatmul.mubr.f32.gmra.mrb[0].mxu0 %v348
  %v435 = vpop.f32.mrb[0].mxu0
  %v436 = vadd.f32 %v335, %v435
  %v437 = vpop.f32.mrb[0].mxu0
  %438 = vdwg.mxu0
  %v439 = vrsqrt.pop %v421
  %v440 = vrsqrt.pop %v426
  %v441 = vrsqrt.pop %v431
  %v442 = vrsqrt.pop %v436
  %v443 = vmul.f32 %v287, %v439
  %v444 = vmul.f32 %v292, %v440
  %v445 = vmul.f32 %v297, %v441
  %v446 = vmul.f32 %v302, %v442
  %447 = vst [vmem:[%s7] sm:$0xff] %v443
  %448 = vst [vmem:[%s7 + $0x8] sm:$0xff] %v444
  %449 = vst [vmem:[%s7 + $0x10] sm:$0xff] %v445
  %450 = vst [vmem:[%s7 + $0x18] sm:$0x3f] %v446
  // Predicated region
  $region30: #{decoder_forward.1} parent=0 // pred_check
    _
  $region31: #{decoder_forward.1} parent=0 // pred_check_branch
    %452 = sbr.rel (0) target = $region33
  $region32: #{decoder_forward.1} parent=0 // pred_region
    _
  $region33: #{decoder_forward.1} parent=0 // pred_fallthru
    _
  // Predicated region
  $region34: #{decoder_forward.1} parent=0 // pred_check
    _
  $region35: #{decoder_forward.1} parent=0 // pred_check_branch
    %454 = sbr.rel (0) target = $region37
  $region36: #{decoder_forward.1} parent=0 // pred_region
    _
  $region37: #{decoder_forward.1} parent=0 // pred_fallthru
    _

</llo_original>
